<compile_context>
chip_gen: v5e
topology: v5e:2x2
jax: 0.10.0
libtpu: 0.0.40
codegen_flags: <defaults>
</compile_context>

<pallas_src>
import jax
import jax.numpy as jnp
from jax.experimental import pallas as pl
from jax.experimental.pallas import tpu as pltpu


def _round_up(n, m):
    return ((n + m - 1) // m) * m


def _cdiv(a, b):
    return -(-a // b)


def _mlp_kernel(w_ref, b_ref, x_ref, o_ref):
    # w_ref: (128, 384)  [ W1_blockdiag | W2_blockdiag | W3_gather (128,16) pad ]
    # b_ref: (8, 128)    row0 = tiled b1, row1 = tiled b2, row2 = broadcast b3
    # x_ref: (rt, 128)   16 samples per row, 8 features each (row-major view)
    # o_ref: (rt, 16)    one sigmoid output per sample slot
    x = x_ref[...]

    w1 = w_ref[:, 0:128]        # (128, 128) block-diag, 16 copies of W1^T (8x8 pad)
    w2 = w_ref[:, 128:256]      # (128, 128) block-diag, 16 copies of W2^T (8x8 pad)
    w3 = w_ref[:, 256:272]      # (128, 16)  column s = W3 at rows 8s..8s+3
    b1 = b_ref[0:1, :]          # (1, 128)
    b2 = b_ref[1:2, :]          # (1, 128)
    b3 = b_ref[2:3, 0:16]       # (1, 16)

    # layer 1: per-sample (8 -> 6, padded to 8); padded slots stay 0 through ReLU
    h = jnp.maximum(jnp.dot(x, w1, preferred_element_type=jnp.float32) + b1, 0.0)
    # layer 2: per-sample (6 -> 4, padded to 8)
    h = jnp.maximum(jnp.dot(h, w2, preferred_element_type=jnp.float32) + b2, 0.0)
    # layer 3: per-sample (4 -> 1), gathered so column s = output of sample slot s
    z = jnp.dot(h, w3, preferred_element_type=jnp.float32) + b3          # (rt, 16)

    # sigmoid(z) = 0.5 * (1 + tanh(z / 2))  (exact, runs on the EUP)
    o_ref[...] = 0.5 * (1.0 + jnp.tanh(0.5 * z))


def pack_params(params):
    """Pack torch-layout params (W:(out,in), b:(out,)) once into the two slabs
    consumed by the kernel. Call this at init, NOT per forward."""
    w1, b1, w2, b2, w3, b3 = params
    eye16 = jnp.eye(16, dtype=jnp.float32)

    def blockdiag(w):  # w: (out, in) -> (128, 128), 16 copies of W^T in 8x8 blocks
        blk = jnp.zeros((8, 8), jnp.float32).at[: w.shape[1], : w.shape[0]].set(w.T)
        return jnp.kron(eye16, blk)

    w1_bd = blockdiag(w1)                                   # (128, 128)
    w2_bd = blockdiag(w2)                                   # (128, 128)
    w3_col = jnp.zeros((8,), jnp.float32).at[:4].set(w3[0])  # (8,)
    w3_g = jnp.kron(eye16, w3_col[:, None])                  # (128, 16)

    w_slab = jnp.zeros((128, 384), jnp.float32)
    w_slab = (
        w_slab.at[:, 0:128].set(w1_bd)
        .at[:, 128:256].set(w2_bd)
        .at[:, 256:272].set(w3_g)
    )

    b1_t = jnp.tile(jnp.zeros((8,), jnp.float32).at[:6].set(b1), 16)   # (128,)
    b2_t = jnp.tile(jnp.zeros((8,), jnp.float32).at[:4].set(b2), 16)   # (128,)
    b_slab = jnp.zeros((8, 128), jnp.float32)
    b_slab = b_slab.at[0].set(b1_t).at[1].set(b2_t).at[2].set(jnp.full((128,), b3[0]))
    return w_slab, b_slab


def mlp_forward(x, packed, *, block_b=32768):
    """x: (B, 8) float32, packed = pack_params(params) -> (B, 1) float32."""
    w_slab, b_slab = packed
    B = x.shape[0]

    # --- batch tiling: large lane-dense tiles, >=2 tiles when possible (v7x) ---
    b128 = _round_up(max(B, 1), 128)
    max_bt = min(block_b, b128)                 # samples per tile, multiple of 128
    n_tiles = _cdiv(b128, max_bt)
    if n_tiles == 1 and b128 >= 256:
        n_tiles = 2                             # let "parallel" use both v7x TCs
    bt = _round_up(_cdiv(b128, n_tiles), 128)
    b_pad = n_tiles * bt
    rt = bt // 16                               # rows per tile (multiple of 8)

    x = x.astype(jnp.float32)
    if b_pad != B:
        x = jnp.pad(x, ((0, b_pad - B), (0, 0)))
    # Free row-major view: 16 samples per 128-lane row. No transpose, no copy.
    x_view = x.reshape(b_pad // 16, 128)

    out = pl.pallas_call(
        _mlp_kernel,
        out_shape=jax.ShapeDtypeStruct((b_pad // 16, 16), jnp.float32),
        grid=(n_tiles,),
        in_specs=[
            pl.BlockSpec((128, 384), lambda i: (0, 0)),   # resident weight slab
            pl.BlockSpec((8, 128), lambda i: (0, 0)),     # resident bias slab
            pl.BlockSpec((rt, 128), lambda i: (i, 0)),    # batch tile (lane dense)
        ],
        out_specs=pl.BlockSpec((rt, 16), lambda i: (i, 0)),
        compiler_params=pltpu.CompilerParams(
            dimension_semantics=("parallel",),            # shard tiles across TCs
        ),
    )(w_slab, b_slab, x_view)

    # (b_pad/16, 16) -> (b_pad,) preserves sample order; drop padding.
    return out.reshape(b_pad)[:B][:, None]


def init_params(key):
    """PyTorch-Linear-style init: W:(out,in), b:(out,), uniform(-1/sqrt(fan_in), +)."""
    def linear(key, fan_in, fan_out):
        kw, kb = jax.random.split(key)
        bound = 1.0 / jnp.sqrt(fan_in)
        w = jax.random.uniform(kw, (fan_out, fan_in), jnp.float32, -bound, bound)
        b = jax.random.uniform(kb, (fan_out,), jnp.float32, -bound, bound)
        return w, b

    k1, k2, k3 = jax.random.split(key, 3)
    w1, b1 = linear(k1, 8, 6)
    w2, b2 = linear(k2, 6, 4)
    w3, b3 = linear(k3, 4, 1)
    return (w1, b1, w2, b2, w3, b3)


def reference_forward(x, params):
    w1, b1, w2, b2, w3, b3 = params
    h = jnp.maximum(x @ w1.T + b1, 0.0)
    h = jnp.maximum(h @ w2.T + b2, 0.0)
    return jax.nn.sigmoid(h @ w3.T + b3)


if __name__ == "__main__":
    key = jax.random.PRNGKey(0)
    k_params, k_x1, k_x2 = jax.random.split(key, 3)

    params = init_params(k_params)
    packed = pack_params(params)            # packed once at init (hoisted out of forward)

    fwd = jax.jit(lambda x: mlp_forward(x, packed))

    # Small case (B=8): exercises batch padding 8 -> 128, single tile.
    x_small = jax.random.normal(k_x1, (8, 8), dtype=jnp.float32)
    out_small = fwd(x_small)
    jax.block_until_ready(out_small)
    ref_small = reference_forward(x_small, params)
    assert out_small.shape == (8, 1)
    assert jnp.allclose(out_small, ref_small, atol=1e-5, rtol=1e-5)

    # Larger case (B=1024): exercises the multi-tile parallel batch grid.
    x_big = jax.random.normal(k_x2, (1024, 8), dtype=jnp.float32)
    out_big = fwd(x_big)
    jax.block_until_ready(out_big)
    ref_big = reference_forward(x_big, params)
    assert out_big.shape == (1024, 1)
    assert jnp.allclose(out_big, ref_big, atol=1e-5, rtol=1e-5)

    print("KERNEL_OK")
</pallas_src>

<mosaic_0001>
module attributes {stable_mosaic.version = 11 : i64} {
  func.func @_mlp_kernel(%arg0: i32, %arg1: memref<128x384xf32, #tpu.memory_space<vmem>>, %arg2: memref<8x128xf32, #tpu.memory_space<vmem>>, %arg3: memref<8x128xf32, #tpu.memory_space<vmem>>, %arg4: memref<8x16xf32, #tpu.memory_space<vmem>>) attributes {dimension_semantics = [#tpu.dimension_semantics<parallel>], iteration_bounds = array<i64: 1>, scalar_prefetch = 0 : i64, scratch_operands = 0 : i64, tpu.core_type = #tpu.core_type<tc>, window_params = [{pipeline_mode = #tpu.pipeline_mode<synchronous>, transform_indices = @transform_0, window_bounds = array<i64: 128, 384>}, {pipeline_mode = #tpu.pipeline_mode<synchronous>, transform_indices = @transform_1, window_bounds = array<i64: 8, 128>}, {transform_indices = @transform_2, window_bounds = array<i64: 8, 128>}, {transform_indices = @transform_3, window_bounds = array<i64: 8, 16>}]} {
    %c0 = arith.constant 0 : index
    %c0_0 = arith.constant 0 : index
    %0 = vector.load %arg3[%c0, %c0_0] : memref<8x128xf32, #tpu.memory_space<vmem>>, vector<8x128xf32>
    %c0_1 = arith.constant 0 : index
    %c0_2 = arith.constant 0 : index
    %1 = vector.load %arg1[%c0_1, %c0_2] : memref<128x384xf32, #tpu.memory_space<vmem>>, vector<128x128xf32>
    %c0_3 = arith.constant 0 : index
    %c128 = arith.constant 128 : index
    %2 = vector.load %arg1[%c0_3, %c128] : memref<128x384xf32, #tpu.memory_space<vmem>>, vector<128x128xf32>
    %c0_4 = arith.constant 0 : index
    %c256 = arith.constant 256 : index
    %3 = vector.load %arg1[%c0_4, %c256] : memref<128x384xf32, #tpu.memory_space<vmem>>, vector<128x16xf32>
    %c0_5 = arith.constant 0 : index
    %c0_6 = arith.constant 0 : index
    %4 = vector.load %arg2[%c0_5, %c0_6] : memref<8x128xf32, #tpu.memory_space<vmem>>, vector<1x128xf32>
    %c1 = arith.constant 1 : index
    %c0_7 = arith.constant 0 : index
    %5 = vector.load %arg2[%c1, %c0_7] : memref<8x128xf32, #tpu.memory_space<vmem>>, vector<1x128xf32>
    %c2 = arith.constant 2 : index
    %c0_8 = arith.constant 0 : index
    %6 = vector.load %arg2[%c2, %c0_8] : memref<8x128xf32, #tpu.memory_space<vmem>>, vector<1x16xf32>
    %cst = arith.constant dense<0.000000e+00> : vector<8x128xf32>
    %7 = tpu.matmul %0, %1, %cst {dimension_numbers = #tpu.dot_dimension_numbers<[1], [0], [0], [1], [0, 0, 1, 1], [], []>} : vector<8x128xf32>, vector<128x128xf32>, vector<8x128xf32> -> vector<8x128xf32>
    %8 = vector.broadcast %4 : vector<1x128xf32> to vector<8x128xf32>
    %9 = arith.addf %7, %8 : vector<8x128xf32>
    %cst_9 = arith.constant 0.000000e+00 : f32
    %10 = vector.broadcast %cst_9 : f32 to vector<8x128xf32>
    %11 = arith.maximumf %9, %10 : vector<8x128xf32>
    %cst_10 = arith.constant dense<0.000000e+00> : vector<8x128xf32>
    %12 = tpu.matmul %11, %2, %cst_10 {dimension_numbers = #tpu.dot_dimension_numbers<[1], [0], [0], [1], [0, 0, 1, 1], [], []>} : vector<8x128xf32>, vector<128x128xf32>, vector<8x128xf32> -> vector<8x128xf32>
    %13 = vector.broadcast %5 : vector<1x128xf32> to vector<8x128xf32>
    %14 = arith.addf %12, %13 : vector<8x128xf32>
    %cst_11 = arith.constant 0.000000e+00 : f32
    %15 = vector.broadcast %cst_11 : f32 to vector<8x128xf32>
    %16 = arith.maximumf %14, %15 : vector<8x128xf32>
    %cst_12 = arith.constant dense<0.000000e+00> : vector<8x16xf32>
    %17 = tpu.matmul %16, %3, %cst_12 {dimension_numbers = #tpu.dot_dimension_numbers<[1], [0], [0], [1], [0, 0, 1, 1], [], []>} : vector<8x128xf32>, vector<128x16xf32>, vector<8x16xf32> -> vector<8x16xf32>
    %18 = vector.broadcast %6 : vector<1x16xf32> to vector<8x16xf32>
    %19 = arith.addf %17, %18 : vector<8x16xf32>
    %cst_13 = arith.constant 5.000000e-01 : f32
    %20 = vector.broadcast %cst_13 : f32 to vector<8x16xf32>
    %21 = arith.mulf %20, %19 : vector<8x16xf32>
    %22 = math.tanh %21 : vector<8x16xf32>
    %cst_14 = arith.constant 1.000000e+00 : f32
    %23 = vector.broadcast %cst_14 : f32 to vector<8x16xf32>
    %24 = arith.addf %23, %22 : vector<8x16xf32>
    %cst_15 = arith.constant 5.000000e-01 : f32
    %25 = vector.broadcast %cst_15 : f32 to vector<8x16xf32>
    %26 = arith.mulf %25, %24 : vector<8x16xf32>
    %c0_16 = arith.constant 0 : index
    %c0_17 = arith.constant 0 : index
    %27 = vector.load %arg4[%c0_16, %c0_17] : memref<8x16xf32, #tpu.memory_space<vmem>>, vector<8x16xf32>
    tpu.vector_store %arg4[%c0_16, %c0_17], %26 {strides = array<i32>} : memref<8x16xf32, #tpu.memory_space<vmem>>, vector<8x16xf32>,
    return
  }
  func.func @transform_0(%arg0: i32) -> (i32, i32) {
    %c0_i32 = arith.constant 0 : i32
    %c0_i32_0 = arith.constant 0 : i32
    %c0_i32_1 = arith.constant 0 : i32
    return %c0_i32, %c0_i32_0 : i32, i32
  }
  func.func @transform_1(%arg0: i32) -> (i32, i32) {
    %c0_i32 = arith.constant 0 : i32
    %c0_i32_0 = arith.constant 0 : i32
    %c0_i32_1 = arith.constant 0 : i32
    return %c0_i32, %c0_i32_0 : i32, i32
  }
  func.func @transform_2(%arg0: i32) -> (i32, i32) {
    %c0_i32 = arith.constant 0 : i32
    %c0_i32_0 = arith.constant 0 : i32
    return %arg0, %c0_i32 : i32, i32
  }
  func.func @transform_3(%arg0: i32) -> (i32, i32) {
    %c0_i32 = arith.constant 0 : i32
    %c0_i32_0 = arith.constant 0 : i32
    return %arg0, %c0_i32 : i32, i32
  }
}

</mosaic_0001>

<llo_original>
// kernel: _lambda_.1
$region0: #{_lambda_.1}
  #allocation0 [shape = 'u32[]', space=smem, size = 0x4, offset = 0x4, fixed_abs, tag = 'smem constant byte address 0x4 - core index']
  #allocation1 [shape = 'u32[72,128]{1,0:T(1,128)}', space=vmem, size = 0x9000, scoped, tag = 'internal scratch']
  %s0 = inlined_call_operand.hbm [shape: f32[128,384], index: 0, kind: input, shape index: {}]
  %s1 = inlined_call_operand.vmem [shape: f32[8,128], index: 1, kind: input, shape index: {}]
  %s2 = inlined_call_operand.vmem [shape: f32[8,128], index: 2, kind: input, shape index: {}]
  %s3 = inlined_call_operand.vmem [shape: f32[8,16], index: 3, kind: output, shape index: {}]
  %s4 = sld [smem:[#allocation0]]
  $region26: #{_lambda_.1} parent=0
    _
  %s6 = ssub.s32 1, %s4
  %s7 = scalar_select 0, %s6, %s4
  $region1: #{_lambda_.1} parent=0
    #allocation2 [shape = 'u8[196608]{0}', space=vmem, size = 0x30000, scoped, tag = 'input window, operand 0, single buffered']
    #allocation3 [shape = 's32[1]{0}', space=sflag, size = 0x4, scoped, tag = 'scoped memory for _lambda_.1']
    %8 = vsyncpa [#allocation3], 0
    // Predicated region
    $region2: #{_lambda_.1} parent=1 // pred_check
      _
    $region3: #{_lambda_.1} parent=1 // pred_check_branch
      %10 = sbr.rel (0) target = $region5
    $region4: #{_lambda_.1} parent=1 // pred_region
      %12 = vsyncadd [#allocation3], 0
      %s13 = sshll.u32 %s0, 4
      %s14 = int_to_ptr.hbm [resolvable:$true] %s13
      %s15 = sshll.u32 [#allocation2], 4
      %s16 = int_to_ptr.vmem [resolvable:$true] %s15
      %21 = dma.hbm_to_vmem [thread:$0]  %s14, 6144, %s16, [#allocation3], 384, 384, 24
    $region5: #{_lambda_.1} parent=1 // pred_fallthru
      _
    // Predicated region
    $region6: #{_lambda_.1} parent=1 // pred_check
      _
    $region7: #{_lambda_.1} parent=1 // pred_check_branch
      %23 = sbr.rel (0) target = $region9
    $region8: #{_lambda_.1} parent=1 // pred_region
      _
    $region9: #{_lambda_.1} parent=1 // pred_fallthru
      _
    // Predicated region
    $region10: #{_lambda_.1} parent=1 // pred_check
      _
    $region11: #{_lambda_.1} parent=1 // pred_check_branch
      %25 = sbr.rel (0) target = $region13
    $region12: #{_lambda_.1} parent=1 // pred_region
      _
    $region13: #{_lambda_.1} parent=1 // pred_fallthru
      _
    // Predicated region
    $region14: #{_lambda_.1} parent=1 // pred_check
      _
    $region15: #{_lambda_.1} parent=1 // pred_check_branch
      %27 = sbr.rel (0) target = $region17
    $region16: #{_lambda_.1} parent=1 // pred_region
      %29 = dma.done [#allocation3], 6144
    $region17: #{_lambda_.1} parent=1 // pred_fallthru
      _
    %v30 = vld [vmem:[%s2] sm:$0xff]
    %v31 = vld [vmem:[#allocation2] sm:$0xff]
    %v32 = vld [vmem:[#allocation2 + $0x18] sm:$0xff]
    %v33 = vld [vmem:[#allocation2 + $0x30] sm:$0xff]
    %v34 = vld [vmem:[#allocation2 + $0x48] sm:$0xff]
    %v35 = vld [vmem:[#allocation2 + $0x60] sm:$0xff]
    %v36 = vld [vmem:[#allocation2 + $0x78] sm:$0xff]
    %v37 = vld [vmem:[#allocation2 + $0x90] sm:$0xff]
    %v38 = vld [vmem:[#allocation2 + $0xa8] sm:$0xff]
    %v39 = vld [vmem:[#allocation2 + $0xc0] sm:$0xff]
    %v40 = vld [vmem:[#allocation2 + $0xd8] sm:$0xff]
    %v41 = vld [vmem:[#allocation2 + $0xf0] sm:$0xff]
    %v42 = vld [vmem:[#allocation2 + $0x108] sm:$0xff]
    %v43 = vld [vmem:[#allocation2 + $0x120] sm:$0xff]
    %v44 = vld [vmem:[#allocation2 + $0x138] sm:$0xff]
    %v45 = vld [vmem:[#allocation2 + $0x150] sm:$0xff]
    %v46 = vld [vmem:[#allocation2 + $0x168] sm:$0xff]
    %v47 = vld [vmem:[#allocation2 + $0x8] sm:$0xff]
    %v48 = vld [vmem:[#allocation2 + $0x20] sm:$0xff]
    %v49 = vld [vmem:[#allocation2 + $0x38] sm:$0xff]
    %v50 = vld [vmem:[#allocation2 + $0x50] sm:$0xff]
    %v51 = vld [vmem:[#allocation2 + $0x68] sm:$0xff]
    %v52 = vld [vmem:[#allocation2 + $0x80] sm:$0xff]
    %v53 = vld [vmem:[#allocation2 + $0x98] sm:$0xff]
    %v54 = vld [vmem:[#allocation2 + $0xb0] sm:$0xff]
    %v55 = vld [vmem:[#allocation2 + $0xc8] sm:$0xff]
    %v56 = vld [vmem:[#allocation2 + $0xe0] sm:$0xff]
    %v57 = vld [vmem:[#allocation2 + $0xf8] sm:$0xff]
    %v58 = vld [vmem:[#allocation2 + $0x110] sm:$0xff]
    %v59 = vld [vmem:[#allocation2 + $0x128] sm:$0xff]
    %v60 = vld [vmem:[#allocation2 + $0x140] sm:$0xff]
    %v61 = vld [vmem:[#allocation2 + $0x158] sm:$0xff]
    %v62 = vld [vmem:[#allocation2 + $0x170] sm:$0xff]
    %v63 = vld [vmem:[#allocation2 + $0x10] sm:$0xff]
    %v64 = vld [vmem:[#allocation2 + $0x28] sm:$0xff]
    %v65 = vld [vmem:[#allocation2 + $0x40] sm:$0xff]
    %v66 = vld [vmem:[#allocation2 + $0x58] sm:$0xff]
    %v67 = vld [vmem:[#allocation2 + $0x70] sm:$0xff]
    %v68 = vld [vmem:[#allocation2 + $0x88] sm:$0xff]
    %v69 = vld [vmem:[#allocation2 + $0xa0] sm:$0xff]
    %v70 = vld [vmem:[#allocation2 + $0xb8] sm:$0xff]
    %v71 = vld [vmem:[#allocation2 + $0xd0] sm:$0xff]
    %v72 = vld [vmem:[#allocation2 + $0xe8] sm:$0xff]
    %v73 = vld [vmem:[#allocation2 + $0x100] sm:$0xff]
    %v74 = vld [vmem:[#allocation2 + $0x118] sm:$0xff]
    %v75 = vld [vmem:[#allocation2 + $0x130] sm:$0xff]
    %v76 = vld [vmem:[#allocation2 + $0x148] sm:$0xff]
    %v77 = vld [vmem:[#allocation2 + $0x160] sm:$0xff]
    %v78 = vld [vmem:[#allocation2 + $0x178] sm:$0xff]
    %v79 = vld [vmem:[%s1] sm:$0x1]
    %v80 = vld [vmem:[%s1 + $0x1] sm:$0x1]
    %v81 = vld [vmem:[%s1 + $0x2] sm:$0x1]
    %v82 = vperm.slane %v79, 0
    %83 = vmatpush.msra.mxu0 %v46
    %84 = vmatpush.msra.mxu0 %v45
    %85 = vmatpush.msra.mxu0 %v44
    %86 = vmatpush.msra.mxu0 %v43
    %87 = vmatpush.msra.mxu0 %v42
    %88 = vmatpush.msra.mxu0 %v41
    %89 = vmatpush.msra.mxu0 %v40
    %90 = vmatpush.msra.mxu0 %v39
    %91 = vmatpush.msra.mxu0 %v38
    %92 = vmatpush.msra.mxu0 %v37
    %93 = vmatpush.msra.mxu0 %v36
    %94 = vmatpush.msra.mxu0 %v35
    %95 = vmatpush.msra.mxu0 %v34
    %96 = vmatpush.msra.mxu0 %v33
    %97 = vmatpush.msra.mxu0 %v32
    %98 = vmatpush.msra.mxu0 %v31
    %99 = vmatmul.f32.gmra.mxu0 %v30
    %v100 = vpop.f32.mrf.mxu0
    %v101 = vadd.f32 %v82, %v100
    %102 = vdwg.mxu0
    %v103 = vmax.f32 %v101, 0.0
    %v104 = vperm.slane %v80, 0
    %105 = vmatpush.msra.mxu0 %v62
    %106 = vmatpush.msra.mxu0 %v61
    %107 = vmatpush.msra.mxu0 %v60
    %108 = vmatpush.msra.mxu0 %v59
    %109 = vmatpush.msra.mxu0 %v58
    %110 = vmatpush.msra.mxu0 %v57
    %111 = vmatpush.msra.mxu0 %v56
    %112 = vmatpush.msra.mxu0 %v55
    %113 = vmatpush.msra.mxu0 %v54
    %114 = vmatpush.msra.mxu0 %v53
    %115 = vmatpush.msra.mxu0 %v52
    %116 = vmatpush.msra.mxu0 %v51
    %117 = vmatpush.msra.mxu0 %v50
    %118 = vmatpush.msra.mxu0 %v49
    %119 = vmatpush.msra.mxu0 %v48
    %120 = vmatpush.msra.mxu0 %v47
    %121 = vmatmul.f32.gmra.mxu0 %v103
    %v122 = vpop.f32.mrf.mxu0
    %v123 = vadd.f32 %v104, %v122
    %124 = vdwg.mxu0
    %v125 = vmax.f32 %v123, 0.0
    %v126 = vperm.slane %v81, 0
    %127 = vmatpush.msra.mxu0 %v78
    %128 = vmatpush.msra.mxu0 %v77
    %129 = vmatpush.msra.mxu0 %v76
    %130 = vmatpush.msra.mxu0 %v75
    %131 = vmatpush.msra.mxu0 %v74
    %132 = vmatpush.msra.mxu0 %v73
    %133 = vmatpush.msra.mxu0 %v72
    %134 = vmatpush.msra.mxu0 %v71
    %135 = vmatpush.msra.mxu0 %v70
    %136 = vmatpush.msra.mxu0 %v69
    %137 = vmatpush.msra.mxu0 %v68
    %138 = vmatpush.msra.mxu0 %v67
    %139 = vmatpush.msra.mxu0 %v66
    %140 = vmatpush.msra.mxu0 %v65
    %141 = vmatpush.msra.mxu0 %v64
    %142 = vmatpush.msra.mxu0 %v63
    %143 = vmatmul.f32.gmra.mxu0 %v125
    %v144 = vpop.f32.mrf.mxu0
    %v145 = vadd.f32 %v126, %v144
    %146 = vdwg.mxu0
    %v147 = vmul.f32 %v145, 0.5
    %v148 = vtanh.pop %v147
    %v149 = vadd.f32 %v148, 1.0
    %v150 = vmul.f32 %v149, 0.5
    %vm151 = vcmask 130048
    %152 = vst.msk [vmem:[%s3] sm:$0xff] %vm151, %v150
    // Predicated region
    $region18: #{_lambda_.1} parent=1 // pred_check
      _
    $region19: #{_lambda_.1} parent=1 // pred_check_branch
      %154 = sbr.rel (0) target = $region21
    $region20: #{_lambda_.1} parent=1 // pred_region
      _
    $region21: #{_lambda_.1} parent=1 // pred_fallthru
      _
    // Predicated region
    $region22: #{_lambda_.1} parent=1 // pred_check
      _
    $region23: #{_lambda_.1} parent=1 // pred_check_branch
      %156 = sbr.rel (0) target = $region25
    $region24: #{_lambda_.1} parent=1 // pred_region
      _
    $region25: #{_lambda_.1} parent=1 // pred_fallthru
      _
    %157 = vsyncpa [#allocation3], 1

</llo_original>
